<compile_context>
chip_gen: v5e
topology: v5e:2x2
jax: 0.10.0
libtpu: 0.0.40
codegen_flags: <defaults>
</compile_context>

<pallas_src>
import jax
import jax.numpy as jnp
from jax.experimental import pallas as pl
from jax.experimental.pallas import tpu as pltpu

BN_EPS = 1e-5


def _make_fused_kernel(n_batch, l1, l2, l3, lp0, p1, p2):
    """Whole-network kernel: 3x (conv k3/s2/p1 -> train-BN -> ReLU) -> mean(L) -> FC."""

    def gather_taps(src_ref, per_sample_rows, l_out):
        # src_ref rows per sample: [pad0, x_0, ..., x_{l_in-1}, pad, ...]
        # tap k of output position t reads padded row (2*t + k)  ->  stride-2 load.
        slabs = []
        for s in range(n_batch):   # TODO(synk): for large N move batch to a grid axis
            base = s * per_sample_rows  # (needs cross-block BN-stat combine).
            taps = [src_ref[pl.ds(base + k, l_out, stride=2), :] for k in range(3)]
            slabs.append(jnp.concatenate(taps, axis=1))      # (l_out, 3*C_in)
        return jnp.concatenate(slabs, axis=0)                # (n*l_out, 3*C_in)

    def bn_relu(y, g_ref, beta_ref):
        # Training-mode BatchNorm folded to one per-channel scale/shift.
        # Centered variance (numerically safer than E[y^2]-E[y]^2).
        # Conv bias omitted: exactly cancelled by the mean subtraction.
        mean = jnp.mean(y, axis=0, keepdims=True)
        yc = y - mean
        var = jnp.mean(yc * yc, axis=0, keepdims=True)
        scale = g_ref[...] * jax.lax.rsqrt(var + BN_EPS)
        return jnp.maximum(yc * scale + beta_ref[...], 0.0)

    def store_padded(act_ref, y, l_out, per_sample_rows):
        # Write a layer's output into the next layer's zero-padded gather buffer.
        act_ref[...] = jnp.zeros_like(act_ref)
        for s in range(n_batch):
            act_ref[pl.ds(s * per_sample_rows + 1, l_out), :] = \
                y[s * l_out:(s + 1) * l_out, :]

    def kernel(x_ref,
               w1_ref, g1_ref, b1_ref,
               w2_ref, g2_ref, b2_ref,
               w3_ref, g3_ref, b3_ref,
               wfc_ref, bfc_ref, o_ref,
               act1_ref, act2_ref):
        # --- layer 1 (gathers straight from the host-padded input ref) ---
        t1 = gather_taps(x_ref, lp0, l1)
        y1 = bn_relu(jnp.dot(t1, w1_ref[...], preferred_element_type=jnp.float32),
                     g1_ref, b1_ref)
        store_padded(act1_ref, y1, l1, p1)

        # --- layer 2 ---
        t2 = gather_taps(act1_ref, p1, l2)
        y2 = bn_relu(jnp.dot(t2, w2_ref[...], preferred_element_type=jnp.float32),
                     g2_ref, b2_ref)
        store_padded(act2_ref, y2, l2, p2)

        # --- layer 3 ---
        t3 = gather_taps(act2_ref, p2, l3)
        y3 = bn_relu(jnp.dot(t3, w3_ref[...], preferred_element_type=jnp.float32),
                     g3_ref, b3_ref)

        # --- mean over length (cheap XLU reduce, no averaging matmul) + FC head ---
        m = jnp.concatenate(
            [jnp.mean(y3[s * l3:(s + 1) * l3, :], axis=0, keepdims=True)
             for s in range(n_batch)], axis=0)                        # (n, C)
        o_ref[...] = (jnp.dot(m, wfc_ref[...], preferred_element_type=jnp.float32)
                      + bfc_ref[...])

    return kernel


@jax.jit
def simple_cnn_forward(x_ncl, kparams):
    """x_ncl: (N, C_in, L) as in PyTorch Conv1d; kparams from prepare_params()."""
    (w1, g1, b1, w2, g2, b2, w3, g3, b3, wfc, bfc) = kparams
    N, C_in, L = x_ncl.shape
    C = w1.shape[1]
    num_classes = wfc.shape[1]

    # PyTorch Conv1d(k=3, pad=1, stride=2): L_out = (L_in + 1) // 2.
    l1 = (L + 1) // 2
    l2 = (l1 + 1) // 2
    l3 = (l2 + 1) // 2
    lp0 = 2 * l1 + 2        # padded rows / sample for the layer-1 gather
    p1 = 2 * l2 + 2         # padded rows / sample for the layer-2 gather buffer
    p2 = 2 * l3 + 2         # padded rows / sample for the layer-3 gather buffer

    # Single boundary layout change: NCL -> channels-last rows, zero-padded so
    # every conv tap (including p = -1 and p = L) is a plain strided row read.
    x_cl = jnp.transpose(x_ncl, (0, 2, 1))                           # (N, L, C_in)
    x_pad = jnp.pad(x_cl, ((0, 0), (1, lp0 - 1 - L), (0, 0)))        # (N, lp0, C_in)
    x_flat = x_pad.reshape(N * lp0, C_in).astype(jnp.float32)

    def spec(a):
        shp = a.shape
        return pl.BlockSpec(shp, lambda *_: (0,) * len(shp))

    # TODO(synk): for large N*L, tile rows with a grid + bf16 MXU operands and a
    #             lane-dense output slab; at this demo size one VMEM-resident call
    #             is optimal.
    return pl.pallas_call(
        _make_fused_kernel(N, l1, l2, l3, lp0, p1, p2),
        out_shape=jax.ShapeDtypeStruct((N, num_classes), jnp.float32),
        in_specs=[spec(x_flat),
                  spec(w1), spec(g1), spec(b1),
                  spec(w2), spec(g2), spec(b2),
                  spec(w3), spec(g3), spec(b3),
                  spec(wfc), spec(bfc)],
        out_specs=pl.BlockSpec((N, num_classes), lambda *_: (0, 0)),
        scratch_shapes=[pltpu.VMEM((N * p1, C), jnp.float32),
                        pltpu.VMEM((N * p2, C), jnp.float32)],
    )(x_flat, w1, g1, b1, w2, g2, b2, w3, g3, b3, wfc, bfc)


# ---------------------- parameters (PyTorch layout) ------------------------- #

def init_params(key, num_classes=5, init_channels=12, channel=16, layers=3):
    conv_params = []
    c_in = init_channels
    for _ in range(layers):
        key, k1, k2, k3, k4 = jax.random.split(key, 5)
        bound = 1.0 / (c_in * 3) ** 0.5
        w = jax.random.uniform(k1, (channel, c_in, 3), jnp.float32, -bound, bound)
        b = jax.random.uniform(k2, (channel,), jnp.float32, -bound, bound)
        gamma = 1.0 + 0.1 * jax.random.normal(k3, (channel,), jnp.float32)
        beta = 0.1 * jax.random.normal(k4, (channel,), jnp.float32)
        conv_params.append((w, b, gamma, beta))
        c_in = channel
    key, k1, k2 = jax.random.split(key, 3)
    bound = 1.0 / channel ** 0.5
    w_fc = jax.random.uniform(k1, (num_classes, channel), jnp.float32, -bound, bound)
    b_fc = jax.random.uniform(k2, (num_classes,), jnp.float32, -bound, bound)
    return conv_params, (w_fc, b_fc)


def prepare_params(conv_params, fc_params):
    """One-time host-side reformat into the layout the fused kernel consumes."""
    flat = []
    for (w, b, gamma, beta) in conv_params:
        del b                                 # conv bias is a no-op under train-mode BN
        c_out, c_in, k = w.shape
        # tap-major stacked weight: row (tap*C_in + i) -> column order of the
        # in-kernel [tap0 | tap1 | tap2] channel concat.
        flat.append(jnp.transpose(w, (2, 1, 0)).reshape(k * c_in, c_out))
        flat.append(gamma.reshape(1, c_out))
        flat.append(beta.reshape(1, c_out))
    w_fc, b_fc = fc_params
    flat.append(jnp.transpose(w_fc))          # (C, num_classes)
    flat.append(b_fc.reshape(1, -1))
    return tuple(flat)


# ------------------------- pure-JAX reference ------------------------------ #

def _reference_forward(x, conv_params, fc_params):
    y = x
    for (w, b, gamma, beta) in conv_params:
        y = jax.lax.conv_general_dilated(
            y, w, window_strides=(2,), padding=((1, 1),),
            dimension_numbers=("NCH", "OIH", "NCH"))
        y = y + b[None, :, None]
        mean = jnp.mean(y, axis=(0, 2), keepdims=True)
        var = jnp.mean((y - mean) ** 2, axis=(0, 2), keepdims=True)
        y = (y - mean) * jax.lax.rsqrt(var + BN_EPS) * gamma[None, :, None] \
            + beta[None, :, None]
        y = jnp.maximum(y, 0.0)
    y = jnp.mean(y, axis=-1)
    w_fc, b_fc = fc_params
    return y @ w_fc.T + b_fc


# TODO(synk): drop_out_rate exists in __init__ but is unused in the PyTorch forward,
#             so no dropout here; BatchNorm running stats are not tracked (train-mode
#             batch statistics only, matching model.train() forward).

if __name__ == "__main__":
    key = jax.random.PRNGKey(0)
    key, kx = jax.random.split(key)

    N, C_IN, L = 2, 12, 16          # (batch, init_channels, sequence length)
    x = jax.random.normal(kx, (N, C_IN, L), jnp.float32)

    conv_params, fc_params = init_params(key)
    kparams = prepare_params(conv_params, fc_params)   # hoisted out of the jitted path

    out = simple_cnn_forward(x, kparams)
    out = jax.block_until_ready(out)
    assert out.shape == (N, 5), out.shape

    ref = _reference_forward(x, conv_params, fc_params)
    assert jnp.allclose(out, ref, rtol=1e-3, atol=1e-3), (out, ref)
    print("KERNEL_OK")
</pallas_src>

<mosaic_0001>
module attributes {stable_mosaic.version = 11 : i64} {
  func.func @kernel(%arg0: memref<36x12xf32, #tpu.memory_space<vmem>>, %arg1: memref<36x16xf32, #tpu.memory_space<vmem>>, %arg2: memref<1x16xf32, #tpu.memory_space<vmem>>, %arg3: memref<1x16xf32, #tpu.memory_space<vmem>>, %arg4: memref<48x16xf32, #tpu.memory_space<vmem>>, %arg5: memref<1x16xf32, #tpu.memory_space<vmem>>, %arg6: memref<1x16xf32, #tpu.memory_space<vmem>>, %arg7: memref<48x16xf32, #tpu.memory_space<vmem>>, %arg8: memref<1x16xf32, #tpu.memory_space<vmem>>, %arg9: memref<1x16xf32, #tpu.memory_space<vmem>>, %arg10: memref<16x5xf32, #tpu.memory_space<vmem>>, %arg11: memref<1x5xf32, #tpu.memory_space<vmem>>, %arg12: memref<2x5xf32, #tpu.memory_space<vmem>>, %arg13: memref<20x16xf32, #tpu.memory_space<vmem>>, %arg14: memref<12x16xf32, #tpu.memory_space<vmem>>) attributes {dimension_semantics = [], scalar_prefetch = 0 : i64, scratch_operands = 2 : i64, tpu.core_type = #tpu.core_type<tc>} {
    %c0 = arith.constant 0 : index
    %c0_0 = arith.constant 0 : index
    %0 = tpu.strided_load %arg0[%c0, %c0_0] {strides = array<i32: 2, 1>} : memref<36x12xf32, #tpu.memory_space<vmem>>, vector<8x12xf32>
    %c1 = arith.constant 1 : index
    %c0_1 = arith.constant 0 : index
    %1 = tpu.strided_load %arg0[%c1, %c0_1] {strides = array<i32: 2, 1>} : memref<36x12xf32, #tpu.memory_space<vmem>>, vector<8x12xf32>
    %c2 = arith.constant 2 : index
    %c0_2 = arith.constant 0 : index
    %2 = tpu.strided_load %arg0[%c2, %c0_2] {strides = array<i32: 2, 1>} : memref<36x12xf32, #tpu.memory_space<vmem>>, vector<8x12xf32>
    %3 = tpu.concatenate %0, %1, %2 in 1 : vector<8x12xf32>, vector<8x12xf32>, vector<8x12xf32> -> vector<8x36xf32>
    %c18 = arith.constant 18 : index
    %c0_3 = arith.constant 0 : index
    %4 = tpu.strided_load %arg0[%c18, %c0_3] {strides = array<i32: 2, 1>} : memref<36x12xf32, #tpu.memory_space<vmem>>, vector<8x12xf32>
    %c19 = arith.constant 19 : index
    %c0_4 = arith.constant 0 : index
    %5 = tpu.strided_load %arg0[%c19, %c0_4] {strides = array<i32: 2, 1>} : memref<36x12xf32, #tpu.memory_space<vmem>>, vector<8x12xf32>
    %c20 = arith.constant 20 : index
    %c0_5 = arith.constant 0 : index
    %6 = tpu.strided_load %arg0[%c20, %c0_5] {strides = array<i32: 2, 1>} : memref<36x12xf32, #tpu.memory_space<vmem>>, vector<8x12xf32>
    %7 = tpu.concatenate %4, %5, %6 in 1 : vector<8x12xf32>, vector<8x12xf32>, vector<8x12xf32> -> vector<8x36xf32>
    %8 = tpu.concatenate %3, %7 in 0 : vector<8x36xf32>, vector<8x36xf32> -> vector<16x36xf32>
    %c0_6 = arith.constant 0 : index
    %c0_7 = arith.constant 0 : index
    %9 = vector.load %arg1[%c0_6, %c0_7] : memref<36x16xf32, #tpu.memory_space<vmem>>, vector<36x16xf32>
    %cst = arith.constant dense<0.000000e+00> : vector<16x16xf32>
    %10 = tpu.matmul %8, %9, %cst {dimension_numbers = #tpu.dot_dimension_numbers<[1], [0], [0], [1], [0, 0, 1, 1], [], []>} : vector<16x36xf32>, vector<36x16xf32>, vector<16x16xf32> -> vector<16x16xf32>
    %cst_8 = arith.constant dense<0.000000e+00> : vector<16xf32>
    %11 = vector.multi_reduction <add>, %10, %cst_8 [0] : vector<16x16xf32> to vector<16xf32>
    %12 = vector.shape_cast %11 : vector<16xf32> to vector<1x16xf32>
    %cst_9 = arith.constant 1.600000e+01 : f32
    %13 = vector.broadcast %cst_9 : f32 to vector<1x16xf32>
    %14 = arith.divf %12, %13 : vector<1x16xf32>
    %15 = vector.broadcast %14 : vector<1x16xf32> to vector<16x16xf32>
    %16 = arith.subf %10, %15 : vector<16x16xf32>
    %17 = arith.mulf %16, %16 : vector<16x16xf32>
    %cst_10 = arith.constant dense<0.000000e+00> : vector<16xf32>
    %18 = vector.multi_reduction <add>, %17, %cst_10 [0] : vector<16x16xf32> to vector<16xf32>
    %19 = vector.shape_cast %18 : vector<16xf32> to vector<1x16xf32>
    %cst_11 = arith.constant 1.600000e+01 : f32
    %20 = vector.broadcast %cst_11 : f32 to vector<1x16xf32>
    %21 = arith.divf %19, %20 : vector<1x16xf32>
    %c0_12 = arith.constant 0 : index
    %c0_13 = arith.constant 0 : index
    %22 = vector.load %arg2[%c0_12, %c0_13] : memref<1x16xf32, #tpu.memory_space<vmem>>, vector<1x16xf32>
    %cst_14 = arith.constant 9.99999974E-6 : f32
    %23 = vector.broadcast %cst_14 : f32 to vector<1x16xf32>
    %24 = arith.addf %21, %23 : vector<1x16xf32>
    %25 = math.rsqrt %24 : vector<1x16xf32>
    %26 = arith.mulf %22, %25 : vector<1x16xf32>
    %27 = vector.broadcast %26 : vector<1x16xf32> to vector<16x16xf32>
    %28 = arith.mulf %16, %27 : vector<16x16xf32>
    %c0_15 = arith.constant 0 : index
    %c0_16 = arith.constant 0 : index
    %29 = vector.load %arg3[%c0_15, %c0_16] : memref<1x16xf32, #tpu.memory_space<vmem>>, vector<1x16xf32>
    %30 = vector.broadcast %29 : vector<1x16xf32> to vector<16x16xf32>
    %31 = arith.addf %28, %30 : vector<16x16xf32>
    %cst_17 = arith.constant 0.000000e+00 : f32
    %32 = vector.broadcast %cst_17 : f32 to vector<16x16xf32>
    %33 = arith.maximumf %31, %32 : vector<16x16xf32>
    %cst_18 = arith.constant 0.000000e+00 : f32
    %34 = vector.broadcast %cst_18 : f32 to vector<20x16xf32>
    %c0_19 = arith.constant 0 : index
    %c0_20 = arith.constant 0 : index
    %35 = vector.load %arg13[%c0_19, %c0_20] : memref<20x16xf32, #tpu.memory_space<vmem>>, vector<20x16xf32>
    tpu.vector_store %arg13[%c0_19, %c0_20], %34 {strides = array<i32>} : memref<20x16xf32, #tpu.memory_space<vmem>>, vector<20x16xf32>,
    %36 = vector.extract_strided_slice %33 {offsets = [0, 0], sizes = [8, 16], strides = [1, 1]} : vector<16x16xf32> to vector<8x16xf32>
    %c1_21 = arith.constant 1 : index
    %c0_22 = arith.constant 0 : index
    %37 = vector.load %arg13[%c1_21, %c0_22] : memref<20x16xf32, #tpu.memory_space<vmem>>, vector<8x16xf32>
    tpu.vector_store %arg13[%c1_21, %c0_22], %36 {strides = array<i32>} : memref<20x16xf32, #tpu.memory_space<vmem>>, vector<8x16xf32>,
    %38 = vector.extract_strided_slice %33 {offsets = [8, 0], sizes = [8, 16], strides = [1, 1]} : vector<16x16xf32> to vector<8x16xf32>
    %c11 = arith.constant 11 : index
    %c0_23 = arith.constant 0 : index
    %39 = vector.load %arg13[%c11, %c0_23] : memref<20x16xf32, #tpu.memory_space<vmem>>, vector<8x16xf32>
    tpu.vector_store %arg13[%c11, %c0_23], %38 {strides = array<i32>} : memref<20x16xf32, #tpu.memory_space<vmem>>, vector<8x16xf32>,
    %c0_24 = arith.constant 0 : index
    %c0_25 = arith.constant 0 : index
    %40 = tpu.strided_load %arg13[%c0_24, %c0_25] {strides = array<i32: 2, 1>} : memref<20x16xf32, #tpu.memory_space<vmem>>, vector<4x16xf32>
    %c1_26 = arith.constant 1 : index
    %c0_27 = arith.constant 0 : index
    %41 = tpu.strided_load %arg13[%c1_26, %c0_27] {strides = array<i32: 2, 1>} : memref<20x16xf32, #tpu.memory_space<vmem>>, vector<4x16xf32>
    %c2_28 = arith.constant 2 : index
    %c0_29 = arith.constant 0 : index
    %42 = tpu.strided_load %arg13[%c2_28, %c0_29] {strides = array<i32: 2, 1>} : memref<20x16xf32, #tpu.memory_space<vmem>>, vector<4x16xf32>
    %43 = tpu.concatenate %40, %41, %42 in 1 : vector<4x16xf32>, vector<4x16xf32>, vector<4x16xf32> -> vector<4x48xf32>
    %c10 = arith.constant 10 : index
    %c0_30 = arith.constant 0 : index
    %44 = tpu.strided_load %arg13[%c10, %c0_30] {strides = array<i32: 2, 1>} : memref<20x16xf32, #tpu.memory_space<vmem>>, vector<4x16xf32>
    %c11_31 = arith.constant 11 : index
    %c0_32 = arith.constant 0 : index
    %45 = tpu.strided_load %arg13[%c11_31, %c0_32] {strides = array<i32: 2, 1>} : memref<20x16xf32, #tpu.memory_space<vmem>>, vector<4x16xf32>
    %c12 = arith.constant 12 : index
    %c0_33 = arith.constant 0 : index
    %46 = tpu.strided_load %arg13[%c12, %c0_33] {strides = array<i32: 2, 1>} : memref<20x16xf32, #tpu.memory_space<vmem>>, vector<4x16xf32>
    %47 = tpu.concatenate %44, %45, %46 in 1 : vector<4x16xf32>, vector<4x16xf32>, vector<4x16xf32> -> vector<4x48xf32>
    %48 = tpu.concatenate %43, %47 in 0 : vector<4x48xf32>, vector<4x48xf32> -> vector<8x48xf32>
    %c0_34 = arith.constant 0 : index
    %c0_35 = arith.constant 0 : index
    %49 = vector.load %arg4[%c0_34, %c0_35] : memref<48x16xf32, #tpu.memory_space<vmem>>, vector<48x16xf32>
    %cst_36 = arith.constant dense<0.000000e+00> : vector<8x16xf32>
    %50 = tpu.matmul %48, %49, %cst_36 {dimension_numbers = #tpu.dot_dimension_numbers<[1], [0], [0], [1], [0, 0, 1, 1], [], []>} : vector<8x48xf32>, vector<48x16xf32>, vector<8x16xf32> -> vector<8x16xf32>
    %cst_37 = arith.constant dense<0.000000e+00> : vector<16xf32>
    %51 = vector.multi_reduction <add>, %50, %cst_37 [0] : vector<8x16xf32> to vector<16xf32>
    %52 = vector.shape_cast %51 : vector<16xf32> to vector<1x16xf32>
    %cst_38 = arith.constant 8.000000e+00 : f32
    %53 = vector.broadcast %cst_38 : f32 to vector<1x16xf32>
    %54 = arith.divf %52, %53 : vector<1x16xf32>
    %55 = vector.broadcast %54 : vector<1x16xf32> to vector<8x16xf32>
    %56 = arith.subf %50, %55 : vector<8x16xf32>
    %57 = arith.mulf %56, %56 : vector<8x16xf32>
    %cst_39 = arith.constant dense<0.000000e+00> : vector<16xf32>
    %58 = vector.multi_reduction <add>, %57, %cst_39 [0] : vector<8x16xf32> to vector<16xf32>
    %59 = vector.shape_cast %58 : vector<16xf32> to vector<1x16xf32>
    %cst_40 = arith.constant 8.000000e+00 : f32
    %60 = vector.broadcast %cst_40 : f32 to vector<1x16xf32>
    %61 = arith.divf %59, %60 : vector<1x16xf32>
    %c0_41 = arith.constant 0 : index
    %c0_42 = arith.constant 0 : index
    %62 = vector.load %arg5[%c0_41, %c0_42] : memref<1x16xf32, #tpu.memory_space<vmem>>, vector<1x16xf32>
    %cst_43 = arith.constant 9.99999974E-6 : f32
    %63 = vector.broadcast %cst_43 : f32 to vector<1x16xf32>
    %64 = arith.addf %61, %63 : vector<1x16xf32>
    %65 = math.rsqrt %64 : vector<1x16xf32>
    %66 = arith.mulf %62, %65 : vector<1x16xf32>
    %67 = vector.broadcast %66 : vector<1x16xf32> to vector<8x16xf32>
    %68 = arith.mulf %56, %67 : vector<8x16xf32>
    %c0_44 = arith.constant 0 : index
    %c0_45 = arith.constant 0 : index
    %69 = vector.load %arg6[%c0_44, %c0_45] : memref<1x16xf32, #tpu.memory_space<vmem>>, vector<1x16xf32>
    %70 = vector.broadcast %69 : vector<1x16xf32> to vector<8x16xf32>
    %71 = arith.addf %68, %70 : vector<8x16xf32>
    %cst_46 = arith.constant 0.000000e+00 : f32
    %72 = vector.broadcast %cst_46 : f32 to vector<8x16xf32>
    %73 = arith.maximumf %71, %72 : vector<8x16xf32>
    %cst_47 = arith.constant 0.000000e+00 : f32
    %74 = vector.broadcast %cst_47 : f32 to vector<12x16xf32>
    %c0_48 = arith.constant 0 : index
    %c0_49 = arith.constant 0 : index
    %75 = vector.load %arg14[%c0_48, %c0_49] : memref<12x16xf32, #tpu.memory_space<vmem>>, vector<12x16xf32>
    tpu.vector_store %arg14[%c0_48, %c0_49], %74 {strides = array<i32>} : memref<12x16xf32, #tpu.memory_space<vmem>>, vector<12x16xf32>,
    %76 = vector.extract_strided_slice %73 {offsets = [0, 0], sizes = [4, 16], strides = [1, 1]} : vector<8x16xf32> to vector<4x16xf32>
    %c1_50 = arith.constant 1 : index
    %c0_51 = arith.constant 0 : index
    %77 = vector.load %arg14[%c1_50, %c0_51] : memref<12x16xf32, #tpu.memory_space<vmem>>, vector<4x16xf32>
    tpu.vector_store %arg14[%c1_50, %c0_51], %76 {strides = array<i32>} : memref<12x16xf32, #tpu.memory_space<vmem>>, vector<4x16xf32>,
    %78 = vector.extract_strided_slice %73 {offsets = [4, 0], sizes = [4, 16], strides = [1, 1]} : vector<8x16xf32> to vector<4x16xf32>
    %c7 = arith.constant 7 : index
    %c0_52 = arith.constant 0 : index
    %79 = vector.load %arg14[%c7, %c0_52] : memref<12x16xf32, #tpu.memory_space<vmem>>, vector<4x16xf32>
    tpu.vector_store %arg14[%c7, %c0_52], %78 {strides = array<i32>} : memref<12x16xf32, #tpu.memory_space<vmem>>, vector<4x16xf32>,
    %c0_53 = arith.constant 0 : index
    %c0_54 = arith.constant 0 : index
    %80 = tpu.strided_load %arg14[%c0_53, %c0_54] {strides = array<i32: 2, 1>} : memref<12x16xf32, #tpu.memory_space<vmem>>, vector<2x16xf32>
    %c1_55 = arith.constant 1 : index
    %c0_56 = arith.constant 0 : index
    %81 = tpu.strided_load %arg14[%c1_55, %c0_56] {strides = array<i32: 2, 1>} : memref<12x16xf32, #tpu.memory_space<vmem>>, vector<2x16xf32>
    %c2_57 = arith.constant 2 : index
    %c0_58 = arith.constant 0 : index
    %82 = tpu.strided_load %arg14[%c2_57, %c0_58] {strides = array<i32: 2, 1>} : memref<12x16xf32, #tpu.memory_space<vmem>>, vector<2x16xf32>
    %83 = tpu.concatenate %80, %81, %82 in 1 : vector<2x16xf32>, vector<2x16xf32>, vector<2x16xf32> -> vector<2x48xf32>
    %c6 = arith.constant 6 : index
    %c0_59 = arith.constant 0 : index
    %84 = tpu.strided_load %arg14[%c6, %c0_59] {strides = array<i32: 2, 1>} : memref<12x16xf32, #tpu.memory_space<vmem>>, vector<2x16xf32>
    %c7_60 = arith.constant 7 : index
    %c0_61 = arith.constant 0 : index
    %85 = tpu.strided_load %arg14[%c7_60, %c0_61] {strides = array<i32: 2, 1>} : memref<12x16xf32, #tpu.memory_space<vmem>>, vector<2x16xf32>
    %c8 = arith.constant 8 : index
    %c0_62 = arith.constant 0 : index
    %86 = tpu.strided_load %arg14[%c8, %c0_62] {strides = array<i32: 2, 1>} : memref<12x16xf32, #tpu.memory_space<vmem>>, vector<2x16xf32>
    %87 = tpu.concatenate %84, %85, %86 in 1 : vector<2x16xf32>, vector<2x16xf32>, vector<2x16xf32> -> vector<2x48xf32>
    %88 = tpu.concatenate %83, %87 in 0 : vector<2x48xf32>, vector<2x48xf32> -> vector<4x48xf32>
    %c0_63 = arith.constant 0 : index
    %c0_64 = arith.constant 0 : index
    %89 = vector.load %arg7[%c0_63, %c0_64] : memref<48x16xf32, #tpu.memory_space<vmem>>, vector<48x16xf32>
    %cst_65 = arith.constant dense<0.000000e+00> : vector<4x16xf32>
    %90 = tpu.matmul %88, %89, %cst_65 {dimension_numbers = #tpu.dot_dimension_numbers<[1], [0], [0], [1], [0, 0, 1, 1], [], []>} : vector<4x48xf32>, vector<48x16xf32>, vector<4x16xf32> -> vector<4x16xf32>
    %cst_66 = arith.constant dense<0.000000e+00> : vector<16xf32>
    %91 = vector.multi_reduction <add>, %90, %cst_66 [0] : vector<4x16xf32> to vector<16xf32>
    %92 = vector.shape_cast %91 : vector<16xf32> to vector<1x16xf32>
    %cst_67 = arith.constant 4.000000e+00 : f32
    %93 = vector.broadcast %cst_67 : f32 to vector<1x16xf32>
    %94 = arith.divf %92, %93 : vector<1x16xf32>
    %95 = vector.broadcast %94 : vector<1x16xf32> to vector<4x16xf32>
    %96 = arith.subf %90, %95 : vector<4x16xf32>
    %97 = arith.mulf %96, %96 : vector<4x16xf32>
    %cst_68 = arith.constant dense<0.000000e+00> : vector<16xf32>
    %98 = vector.multi_reduction <add>, %97, %cst_68 [0] : vector<4x16xf32> to vector<16xf32>
    %99 = vector.shape_cast %98 : vector<16xf32> to vector<1x16xf32>
    %cst_69 = arith.constant 4.000000e+00 : f32
    %100 = vector.broadcast %cst_69 : f32 to vector<1x16xf32>
    %101 = arith.divf %99, %100 : vector<1x16xf32>
    %c0_70 = arith.constant 0 : index
    %c0_71 = arith.constant 0 : index
    %102 = vector.load %arg8[%c0_70, %c0_71] : memref<1x16xf32, #tpu.memory_space<vmem>>, vector<1x16xf32>
    %cst_72 = arith.constant 9.99999974E-6 : f32
    %103 = vector.broadcast %cst_72 : f32 to vector<1x16xf32>
    %104 = arith.addf %101, %103 : vector<1x16xf32>
    %105 = math.rsqrt %104 : vector<1x16xf32>
    %106 = arith.mulf %102, %105 : vector<1x16xf32>
    %107 = vector.broadcast %106 : vector<1x16xf32> to vector<4x16xf32>
    %108 = arith.mulf %96, %107 : vector<4x16xf32>
    %c0_73 = arith.constant 0 : index
    %c0_74 = arith.constant 0 : index
    %109 = vector.load %arg9[%c0_73, %c0_74] : memref<1x16xf32, #tpu.memory_space<vmem>>, vector<1x16xf32>
    %110 = vector.broadcast %109 : vector<1x16xf32> to vector<4x16xf32>
    %111 = arith.addf %108, %110 : vector<4x16xf32>
    %cst_75 = arith.constant 0.000000e+00 : f32
    %112 = vector.broadcast %cst_75 : f32 to vector<4x16xf32>
    %113 = arith.maximumf %111, %112 : vector<4x16xf32>
    %114 = vector.extract_strided_slice %113 {offsets = [0, 0], sizes = [2, 16], strides = [1, 1]} : vector<4x16xf32> to vector<2x16xf32>
    %cst_76 = arith.constant dense<0.000000e+00> : vector<16xf32>
    %115 = vector.multi_reduction <add>, %114, %cst_76 [0] : vector<2x16xf32> to vector<16xf32>
    %116 = vector.shape_cast %115 : vector<16xf32> to vector<1x16xf32>
    %cst_77 = arith.constant 2.000000e+00 : f32
    %117 = vector.broadcast %cst_77 : f32 to vector<1x16xf32>
    %118 = arith.divf %116, %117 : vector<1x16xf32>
    %119 = vector.extract_strided_slice %113 {offsets = [2, 0], sizes = [2, 16], strides = [1, 1]} : vector<4x16xf32> to vector<2x16xf32>
    %cst_78 = arith.constant dense<0.000000e+00> : vector<16xf32>
    %120 = vector.multi_reduction <add>, %119, %cst_78 [0] : vector<2x16xf32> to vector<16xf32>
    %121 = vector.shape_cast %120 : vector<16xf32> to vector<1x16xf32>
    %cst_79 = arith.constant 2.000000e+00 : f32
    %122 = vector.broadcast %cst_79 : f32 to vector<1x16xf32>
    %123 = arith.divf %121, %122 : vector<1x16xf32>
    %124 = tpu.concatenate %118, %123 in 0 : vector<1x16xf32>, vector<1x16xf32> -> vector<2x16xf32>
    %c0_80 = arith.constant 0 : index
    %c0_81 = arith.constant 0 : index
    %125 = vector.load %arg10[%c0_80, %c0_81] : memref<16x5xf32, #tpu.memory_space<vmem>>, vector<16x5xf32>
    %cst_82 = arith.constant dense<0.000000e+00> : vector<2x5xf32>
    %126 = tpu.matmul %124, %125, %cst_82 {dimension_numbers = #tpu.dot_dimension_numbers<[1], [0], [0], [1], [0, 0, 1, 1], [], []>} : vector<2x16xf32>, vector<16x5xf32>, vector<2x5xf32> -> vector<2x5xf32>
    %c0_83 = arith.constant 0 : index
    %c0_84 = arith.constant 0 : index
    %127 = vector.load %arg11[%c0_83, %c0_84] : memref<1x5xf32, #tpu.memory_space<vmem>>, vector<1x5xf32>
    %128 = vector.broadcast %127 : vector<1x5xf32> to vector<2x5xf32>
    %129 = arith.addf %126, %128 : vector<2x5xf32>
    %c0_85 = arith.constant 0 : index
    %c0_86 = arith.constant 0 : index
    %130 = vector.load %arg12[%c0_85, %c0_86] : memref<2x5xf32, #tpu.memory_space<vmem>>, vector<2x5xf32>
    tpu.vector_store %arg12[%c0_85, %c0_86], %129 {strides = array<i32>} : memref<2x5xf32, #tpu.memory_space<vmem>>, vector<2x5xf32>,
    return
  }
}

</mosaic_0001>

<llo_original>
// kernel: simple_cnn_forward.1
$region0: #{simple_cnn_forward.1}
  #allocation0 [shape = 'u32[]', space=smem, size = 0x4, offset = 0x4, fixed_abs, tag = 'smem constant byte address 0x4 - core index']
  #allocation1 [shape = 'u32[72,128]{1,0:T(1,128)}', space=vmem, size = 0x9000, scoped, tag = 'internal scratch']
  #allocation2 [shape = 'f32[20,16]{1,0:T(8,128)}', space=vmem, size = 0x3000, scoped, tag = 'scratch operand']
  #allocation3 [shape = 'f32[12,16]{1,0:T(8,128)}', space=vmem, size = 0x2000, scoped, tag = 'scratch operand']
  %s0 = inlined_call_operand.vmem [shape: f32[36,12], index: 0, kind: input, shape index: {}]
  %s1 = inlined_call_operand.vmem [shape: f32[36,16], index: 1, kind: input, shape index: {}]
  %s2 = inlined_call_operand.vmem [shape: f32[1,16], index: 2, kind: input, shape index: {}]
  %s3 = inlined_call_operand.vmem [shape: f32[1,16], index: 3, kind: input, shape index: {}]
  %s4 = inlined_call_operand.vmem [shape: f32[48,16], index: 4, kind: input, shape index: {}]
  %s5 = inlined_call_operand.vmem [shape: f32[1,16], index: 5, kind: input, shape index: {}]
  %s6 = inlined_call_operand.vmem [shape: f32[1,16], index: 6, kind: input, shape index: {}]
  %s7 = inlined_call_operand.vmem [shape: f32[48,16], index: 7, kind: input, shape index: {}]
  %s8 = inlined_call_operand.vmem [shape: f32[1,16], index: 8, kind: input, shape index: {}]
  %s9 = inlined_call_operand.vmem [shape: f32[1,16], index: 9, kind: input, shape index: {}]
  %s10 = inlined_call_operand.vmem [shape: f32[16,5], index: 10, kind: input, shape index: {}]
  %s11 = inlined_call_operand.vmem [shape: f32[1,5], index: 11, kind: input, shape index: {}]
  %s12 = inlined_call_operand.hbm [shape: f32[2,5], index: 12, kind: output, shape index: {}]
  %s13 = sld [smem:[#allocation0]]
  $region58: #{simple_cnn_forward.1} parent=0
    _
  %s15 = ssub.s32 1, %s13
  %s16 = scalar_select 0, %s15, %s13
  $region1: #{simple_cnn_forward.1} parent=0
    #allocation4 [shape = 'u8[1024]{0}', space=vmem, size = 0x400, scoped, tag = 'output window, operand 0, single buffered']
    #allocation5 [shape = 's32[1]{0}', space=sflag, size = 0x4, scoped, tag = 'scoped memory for simple_cnn_forward.1']
    %17 = vsyncpa [#allocation5], 0
    // Predicated region
    $region2: #{simple_cnn_forward.1} parent=1 // pred_check
      _
    $region3: #{simple_cnn_forward.1} parent=1 // pred_check_branch
      %19 = sbr.rel (0) target = $region5
    $region4: #{simple_cnn_forward.1} parent=1 // pred_region
      _
    $region5: #{simple_cnn_forward.1} parent=1 // pred_fallthru
      _
    // Predicated region
    $region6: #{simple_cnn_forward.1} parent=1 // pred_check
      _
    $region7: #{simple_cnn_forward.1} parent=1 // pred_check_branch
      %21 = sbr.rel (0) target = $region9
    $region8: #{simple_cnn_forward.1} parent=1 // pred_region
      _
    $region9: #{simple_cnn_forward.1} parent=1 // pred_fallthru
      _
    // Predicated region
    $region10: #{simple_cnn_forward.1} parent=1 // pred_check
      _
    $region11: #{simple_cnn_forward.1} parent=1 // pred_check_branch
      %23 = sbr.rel (0) target = $region13
    $region12: #{simple_cnn_forward.1} parent=1 // pred_region
      _
    $region13: #{simple_cnn_forward.1} parent=1 // pred_fallthru
      _
    // Predicated region
    $region14: #{simple_cnn_forward.1} parent=1 // pred_check
      _
    $region15: #{simple_cnn_forward.1} parent=1 // pred_check_branch
      %25 = sbr.rel (0) target = $region17
    $region16: #{simple_cnn_forward.1} parent=1 // pred_region
      _
    $region17: #{simple_cnn_forward.1} parent=1 // pred_fallthru
      _
    // Predicated region
    $region18: #{simple_cnn_forward.1} parent=1 // pred_check
      _
    $region19: #{simple_cnn_forward.1} parent=1 // pred_check_branch
      %27 = sbr.rel (0) target = $region21
    $region20: #{simple_cnn_forward.1} parent=1 // pred_region
      _
    $region21: #{simple_cnn_forward.1} parent=1 // pred_fallthru
      _
    // Predicated region
    $region22: #{simple_cnn_forward.1} parent=1 // pred_check
      _
    $region23: #{simple_cnn_forward.1} parent=1 // pred_check_branch
      %29 = sbr.rel (0) target = $region25
    $region24: #{simple_cnn_forward.1} parent=1 // pred_region
      _
    $region25: #{simple_cnn_forward.1} parent=1 // pred_fallthru
      _
    // Predicated region
    $region26: #{simple_cnn_forward.1} parent=1 // pred_check
      _
    $region27: #{simple_cnn_forward.1} parent=1 // pred_check_branch
      %31 = sbr.rel (0) target = $region29
    $region28: #{simple_cnn_forward.1} parent=1 // pred_region
      _
    $region29: #{simple_cnn_forward.1} parent=1 // pred_fallthru
      _
    // Predicated region
    $region30: #{simple_cnn_forward.1} parent=1 // pred_check
      _
    $region31: #{simple_cnn_forward.1} parent=1 // pred_check_branch
      %33 = sbr.rel (0) target = $region33
    $region32: #{simple_cnn_forward.1} parent=1 // pred_region
      _
    $region33: #{simple_cnn_forward.1} parent=1 // pred_fallthru
      _
    // Predicated region
    $region34: #{simple_cnn_forward.1} parent=1 // pred_check
      _
    $region35: #{simple_cnn_forward.1} parent=1 // pred_check_branch
      %35 = sbr.rel (0) target = $region37
    $region36: #{simple_cnn_forward.1} parent=1 // pred_region
      _
    $region37: #{simple_cnn_forward.1} parent=1 // pred_fallthru
      _
    // Predicated region
    $region38: #{simple_cnn_forward.1} parent=1 // pred_check
      _
    $region39: #{simple_cnn_forward.1} parent=1 // pred_check_branch
      %37 = sbr.rel (0) target = $region41
    $region40: #{simple_cnn_forward.1} parent=1 // pred_region
      _
    $region41: #{simple_cnn_forward.1} parent=1 // pred_fallthru
      _
    // Predicated region
    $region42: #{simple_cnn_forward.1} parent=1 // pred_check
      _
    $region43: #{simple_cnn_forward.1} parent=1 // pred_check_branch
      %39 = sbr.rel (0) target = $region45
    $region44: #{simple_cnn_forward.1} parent=1 // pred_region
      _
    $region45: #{simple_cnn_forward.1} parent=1 // pred_fallthru
      _
    // Predicated region
    $region46: #{simple_cnn_forward.1} parent=1 // pred_check
      _
    $region47: #{simple_cnn_forward.1} parent=1 // pred_check_branch
      %41 = sbr.rel (0) target = $region49
    $region48: #{simple_cnn_forward.1} parent=1 // pred_region
      _
    $region49: #{simple_cnn_forward.1} parent=1 // pred_fallthru
      _
    %v42 = vld [vmem:[%s0] ss:$2 sm:$0xff]
    %s43 = scalar_lea.vmem %s0, 1
    %v44 = vld [vmem:[%s43] ss:$2 sm:$0xff]
    %s45 = scalar_lea.vmem %s0, 2
    %v46 = vld [vmem:[%s45] ss:$2 sm:$0xff]
    %48 = vrot.lane.b32.xlu0 %v44, 12
    %v49 = vpop.permute.xlu0 %48
    %52 = vrot.lane.b32.xlu0 %v46, 24
    %v53 = vpop.permute.xlu0 %52
    %vm55 = vcmask 97280
    %v56 = vsel %vm55, %v42, %v49
    %vm57 = vcmask 195584
    %v58 = vsel %vm57, %v56, %v53
    %s59 = scalar_lea.vmem %s0, 18
    %v60 = vld [vmem:[%s59] ss:$2 sm:$0xff]
    %s61 = scalar_lea.vmem %s0, 19
    %v62 = vld [vmem:[%s61] ss:$2 sm:$0xff]
    %s63 = scalar_lea.vmem %s0, 20
    %v64 = vld [vmem:[%s63] ss:$2 sm:$0xff]
    %66 = vrot.lane.b32.xlu0 %v62, 12
    %v67 = vpop.permute.xlu0 %66
    %70 = vrot.lane.b32.xlu0 %v64, 24
    %v71 = vpop.permute.xlu0 %70
    %v73 = vsel %vm55, %v60, %v67
    %v74 = vsel %vm57, %v73, %v71
    %v75 = vld [vmem:[%s1] sm:$0xff]
    %v76 = vld [vmem:[%s1 + $0x8] sm:$0xff]
    %v77 = vld [vmem:[%s1 + $0x10] sm:$0xff]
    %v78 = vld [vmem:[%s1 + $0x18] sm:$0xff]
    %v79 = vld [vmem:[%s1 + $0x20] sm:$0xf]
    %vm80 = vcmask 293888
    %v82 = vsel %vm80, %v58, 0
    %v85 = vsel %vm80, %v74, 0
    %vm87 = vcmask 1043456
    %v89 = vsel %vm87, %v79, 0
    %91 = vmatpush.msra.mxu0 0.0
    %92 = vmatpush.msra.mxu0 0.0
    %93 = vmatpush.msra.mxu0 0.0
    %94 = vmatpush.msra.mxu0 0.0
    %95 = vmatpush.msra.mxu0 0.0
    %96 = vmatpush.msra.mxu0 0.0
    %97 = vmatpush.msra.mxu0 0.0
    %98 = vmatpush.msra.mxu0 0.0
    %99 = vmatpush.msra.mxu0 0.0
    %100 = vmatpush.msra.mxu0 0.0
    %101 = vmatpush.msra.mxu0 0.0
    %102 = vmatpush.msra.mxu0 %v89
    %103 = vmatpush.msra.mxu0 %v78
    %104 = vmatpush.msra.mxu0 %v77
    %105 = vmatpush.msra.mxu0 %v76
    %106 = vmatpush.msra.mxu0 %v75
    %107 = vmatmul.f32.gmra.mxu0 %v82
    %v108 = vpop.f32.mrf.mxu0
    %v109 = vadd.f32 0.0, %v108
    %110 = vmatmul.f32.gmra.mxu0 %v85
    %v111 = vpop.f32.mrf.mxu0
    %v112 = vadd.f32 0.0, %v111
    %113 = vdwg.mxu0
    %vm114 = vcmask 130048
    %v115 = vsel %vm114, %v109, 0.0
    %v116 = vsel %vm114, %v112, 0.0
    %v117 = vadd.f32 %v115, %v116
    %v118 = vrot.slane %v117, 4
    %v119 = vadd.f32 %v117, %v118
    %v120 = vrot.slane %v119, 2
    %v121 = vadd.f32 %v119, %v120
    %v122 = vrot.slane %v121, 1
    %v123 = vadd.f32 %v121, %v122
    %v124 = vrcp.pop 16.0
    %v125 = vmul.f32 16.0, %v124
    %v126 = vsub.f32 1.0, %v125
    %v127 = vmul.f32 %v124, %v126
    %v128 = vadd.f32 %v124, %v127
    %vm129 = vweird.f32 %v124
    %v130 = vsel %vm129, %v124, %v128
    %v131 = vmul.f32 %v123, %v130
    %v132 = vsub.f32 %v109, %v131
    %v133 = vsub.f32 %v112, %v131
    %v134 = vmul.f32 %v132, %v132
    %v135 = vmul.f32 %v133, %v133
    %v136 = vsel %vm114, %v134, 0.0
    %v137 = vsel %vm114, %v135, 0.0
    %v138 = vadd.f32 %v136, %v137
    %v139 = vrot.slane %v138, 4
    %v140 = vadd.f32 %v138, %v139
    %v141 = vrot.slane %v140, 2
    %v142 = vadd.f32 %v140, %v141
    %v143 = vrot.slane %v142, 1
    %v144 = vadd.f32 %v142, %v143
    %v145 = vmul.f32 %v144, %v130
    %v146 = vld [vmem:[%s2] sm:$0x1]
    %v147 = vadd.f32 %v145, 1e-05
    %v148 = vrsqrt.pop %v147
    %v149 = vmul.f32 %v148, %v147
    %v150 = vmul.f32 %v149, %v148
    %v151 = vmul.f32 0.5, %v150
    %v152 = vsub.f32 1.5, %v151
    %v153 = vmul.f32 %v148, %v152
    %vm154 = vweird.f32 %v147
    %vm155 = vweird.f32 %v148
    %vm156 = vmor %vm154, %vm155
    %v157 = vsel %vm156, %v148, %v153
    %v158 = vmul.f32 %v146, %v157
    %v160 = vperm.slane %v158, 0
    %v162 = vmul.f32 %v132, %v160
    %v163 = vmul.f32 %v133, %v160
    %v164 = vld [vmem:[%s3] sm:$0x1]
    %v166 = vperm.slane %v164, 0
    %v168 = vadd.f32 %v162, %v166
    %v169 = vadd.f32 %v163, %v166
    %v170 = vmax.f32 %v168, 0.0
    %v171 = vmax.f32 %v169, 0.0
    %172 = vst.msk [vmem:[#allocation2] sm:$0xff] %vm114, 0.0
    %173 = vst.msk [vmem:[#allocation2 + $0x8] sm:$0xff] %vm114, 0.0
    %vm174 = vcmask 125952
    %175 = vst.msk [vmem:[#allocation2 + $0x10] sm:$0xf] %vm174, 0.0
    %176 = vst.msk [vmem:[#allocation2 + $0x1] sm:$0xff] %vm114, %v170
    %177 = vst.msk [vmem:[#allocation2 + $0xb] sm:$0xff] %vm114, %v171
    %v178 = vld [vmem:[#allocation2] ss:$2 sm:$0xf]
    %s179 = scalar_lea.vmem [#allocation2], 1
    %v180 = vld [vmem:[%s179] ss:$2 sm:$0xf]
    %s181 = scalar_lea.vmem [#allocation2], 2
    %v182 = vld [vmem:[%s181] ss:$2 sm:$0xf]
    %184 = vrot.lane.b32.xlu0 %v180, 16
    %v185 = vpop.permute.xlu0 %184
    %188 = vrot.lane.b32.xlu0 %v182, 32
    %v189 = vpop.permute.xlu0 %188
    %v191 = vsel %vm114, %v178, %v185
    %vm192 = vcmask 261120
    %v193 = vsel %vm192, %v191, %v189
    %s194 = scalar_lea.vmem [#allocation2], 10
    %v195 = vld [vmem:[%s194] ss:$2 sm:$0xf]
    %s196 = scalar_lea.vmem [#allocation2], 11
    %v197 = vld [vmem:[%s196] ss:$2 sm:$0xf]
    %s198 = scalar_lea.vmem [#allocation2], 12
    %v199 = vld [vmem:[%s198] ss:$2 sm:$0xf]
    %201 = vrot.lane.b32.xlu0 %v197, 16
    %v202 = vpop.permute.xlu0 %201
    %205 = vrot.lane.b32.xlu0 %v199, 32
    %v206 = vpop.permute.xlu0 %205
    %v208 = vsel %vm114, %v195, %v202
    %v209 = vsel %vm192, %v208, %v206
    %v211 = vrot.slane %v209, 4
    %v213 = vsel %vm87, %v193, %v211
    %v214 = vld [vmem:[%s4] sm:$0xff]
    %v215 = vld [vmem:[%s4 + $0x8] sm:$0xff]
    %v216 = vld [vmem:[%s4 + $0x10] sm:$0xff]
    %v217 = vld [vmem:[%s4 + $0x18] sm:$0xff]
    %v218 = vld [vmem:[%s4 + $0x20] sm:$0xff]
    %v219 = vld [vmem:[%s4 + $0x28] sm:$0xff]
    %vm220 = vcmask 392192
    %v222 = vsel %vm220, %v213, 0
    %224 = vmatpush.msra.mxu0 0.0
    %225 = vmatpush.msra.mxu0 0.0
    %226 = vmatpush.msra.mxu0 0.0
    %227 = vmatpush.msra.mxu0 0.0
    %228 = vmatpush.msra.mxu0 0.0
    %229 = vmatpush.msra.mxu0 0.0
    %230 = vmatpush.msra.mxu0 0.0
    %231 = vmatpush.msra.mxu0 0.0
    %232 = vmatpush.msra.mxu0 0.0
    %233 = vmatpush.msra.mxu0 0.0
    %234 = vmatpush.msra.mxu0 %v219
    %235 = vmatpush.msra.mxu0 %v218
    %236 = vmatpush.msra.mxu0 %v217
    %237 = vmatpush.msra.mxu0 %v216
    %238 = vmatpush.msra.mxu0 %v215
    %239 = vmatpush.msra.mxu0 %v214
    %240 = vmatmul.f32.gmra.mxu0 %v222
    %v241 = vpop.f32.mrf.mxu0
    %v242 = vadd.f32 0.0, %v241
    %243 = vdwg.mxu0
    %v244 = vsel %vm114, %v242, 0.0
    %v245 = vrot.slane %v244, 4
    %v246 = vadd.f32 %v244, %v245
    %v247 = vrot.slane %v246, 2
    %v248 = vadd.f32 %v246, %v247
    %v249 = vrot.slane %v248, 1
    %v250 = vadd.f32 %v248, %v249
    %v251 = vrcp.pop 8.0
    %v252 = vmul.f32 8.0, %v251
    %v253 = vsub.f32 1.0, %v252
    %v254 = vmul.f32 %v251, %v253
    %v255 = vadd.f32 %v251, %v254
    %vm256 = vweird.f32 %v251
    %v257 = vsel %vm256, %v251, %v255
    %v258 = vmul.f32 %v250, %v257
    %v259 = vsub.f32 %v242, %v258
    %v260 = vmul.f32 %v259, %v259
    %v261 = vsel %vm114, %v260, 0.0
    %v262 = vrot.slane %v261, 4
    %v263 = vadd.f32 %v261, %v262
    %v264 = vrot.slane %v263, 2
    %v265 = vadd.f32 %v263, %v264
    %v266 = vrot.slane %v265, 1
    %v267 = vadd.f32 %v265, %v266
    %v268 = vmul.f32 %v267, %v257
    %v269 = vld [vmem:[%s5] sm:$0x1]
    %v270 = vadd.f32 %v268, 1e-05
    %v271 = vrsqrt.pop %v270
    %v272 = vmul.f32 %v271, %v270
    %v273 = vmul.f32 %v272, %v271
    %v274 = vmul.f32 0.5, %v273
    %v275 = vsub.f32 1.5, %v274
    %v276 = vmul.f32 %v271, %v275
    %vm277 = vweird.f32 %v270
    %vm278 = vweird.f32 %v271
    %vm279 = vmor %vm277, %vm278
    %v280 = vsel %vm279, %v271, %v276
    %v281 = vmul.f32 %v269, %v280
    %v283 = vperm.slane %v281, 0
    %v285 = vmul.f32 %v259, %v283
    %v286 = vld [vmem:[%s6] sm:$0x1]
    %v288 = vperm.slane %v286, 0
    %v290 = vadd.f32 %v285, %v288
    %v291 = vmax.f32 %v290, 0.0
    %292 = vst.msk [vmem:[#allocation3] sm:$0xff] %vm114, 0.0
    %293 = vst.msk [vmem:[#allocation3 + $0x8] sm:$0xf] %vm174, 0.0
    %294 = vst.msk [vmem:[#allocation3 + $0x1] sm:$0xf] %vm174, %v291
    %vm295 = vcmask 130052
    %296 = vst.msk [vmem:[#allocation3 + $0x3] sm:$0xf0] %vm295, %v291
    %v297 = vld [vmem:[#allocation3] ss:$2 sm:$0x3]
    %s298 = scalar_lea.vmem [#allocation3], 1
    %v299 = vld [vmem:[%s298] ss:$2 sm:$0x3]
    %s300 = scalar_lea.vmem [#allocation3], 2
    %v301 = vld [vmem:[%s300] ss:$2 sm:$0x3]
    %303 = vrot.lane.b32.xlu0 %v299, 16
    %v304 = vpop.permute.xlu0 %303
    %307 = vrot.lane.b32.xlu0 %v301, 32
    %v308 = vpop.permute.xlu0 %307
    %v310 = vsel %vm114, %v297, %v304
    %v311 = vsel %vm192, %v310, %v308
    %s312 = scalar_lea.vmem [#allocation3], 6
    %v313 = vld [vmem:[%s312] ss:$2 sm:$0x3]
    %s314 = scalar_lea.vmem [#allocation3], 7
    %v315 = vld [vmem:[%s314] ss:$2 sm:$0x3]
    %s316 = scalar_lea.vmem [#allocation3], 8
    %v317 = vld [vmem:[%s316] ss:$2 sm:$0x3]
    %319 = vrot.lane.b32.xlu0 %v315, 16
    %v320 = vpop.permute.xlu0 %319
    %323 = vrot.lane.b32.xlu0 %v317, 32
    %v324 = vpop.permute.xlu0 %323
    %v326 = vsel %vm114, %v313, %v320
    %v327 = vsel %vm192, %v326, %v324
    %v329 = vrot.slane %v327, 6
    %vm331 = vcmask 1041408
    %v332 = vsel %vm331, %v311, %v329
    %v333 = vld [vmem:[%s7] sm:$0xff]
    %v334 = vld [vmem:[%s7 + $0x8] sm:$0xff]
    %v335 = vld [vmem:[%s7 + $0x10] sm:$0xff]
    %v336 = vld [vmem:[%s7 + $0x18] sm:$0xff]
    %v337 = vld [vmem:[%s7 + $0x20] sm:$0xff]
    %v338 = vld [vmem:[%s7 + $0x28] sm:$0xff]
    %v340 = vsel %vm220, %v332, 0
    %342 = vmatpush.msra.mxu0 0.0
    %343 = vmatpush.msra.mxu0 0.0
    %344 = vmatpush.msra.mxu0 0.0
    %345 = vmatpush.msra.mxu0 0.0
    %346 = vmatpush.msra.mxu0 0.0
    %347 = vmatpush.msra.mxu0 0.0
    %348 = vmatpush.msra.mxu0 0.0
    %349 = vmatpush.msra.mxu0 0.0
    %350 = vmatpush.msra.mxu0 0.0
    %351 = vmatpush.msra.mxu0 0.0
    %352 = vmatpush.msra.mxu0 %v338
    %353 = vmatpush.msra.mxu0 %v337
    %354 = vmatpush.msra.mxu0 %v336
    %355 = vmatpush.msra.mxu0 %v335
    %356 = vmatpush.msra.mxu0 %v334
    %357 = vmatpush.msra.mxu0 %v333
    %358 = vmatmul.f32.gmra.mxu0 %v340
    %v359 = vpop.f32.mrf.mxu0
    %v360 = vadd.f32 0.0, %v359
    %361 = vdwg.mxu0
    %v362 = vsel %vm174, %v360, 0.0
    %v363 = vrot.slane %v362, 4
    %v364 = vadd.f32 %v362, %v363
    %v365 = vrot.slane %v364, 2
    %v366 = vadd.f32 %v364, %v365
    %v367 = vrot.slane %v366, 1
    %v368 = vadd.f32 %v366, %v367
    %v369 = vrcp.pop 4.0
    %v370 = vmul.f32 4.0, %v369
    %v371 = vsub.f32 1.0, %v370
    %v372 = vmul.f32 %v369, %v371
    %v373 = vadd.f32 %v369, %v372
    %vm374 = vweird.f32 %v369
    %v375 = vsel %vm374, %v369, %v373
    %v376 = vmul.f32 %v368, %v375
    %v377 = vsub.f32 %v360, %v376
    %v378 = vmul.f32 %v377, %v377
    %v379 = vsel %vm174, %v378, 0.0
    %v380 = vrot.slane %v379, 4
    %v381 = vadd.f32 %v379, %v380
    %v382 = vrot.slane %v381, 2
    %v383 = vadd.f32 %v381, %v382
    %v384 = vrot.slane %v383, 1
    %v385 = vadd.f32 %v383, %v384
    %v386 = vmul.f32 %v385, %v375
    %v387 = vld [vmem:[%s8] sm:$0x1]
    %v388 = vadd.f32 %v386, 1e-05
    %v389 = vrsqrt.pop %v388
    %v390 = vmul.f32 %v389, %v388
    %v391 = vmul.f32 %v390, %v389
    %v392 = vmul.f32 0.5, %v391
    %v393 = vsub.f32 1.5, %v392
    %v394 = vmul.f32 %v389, %v393
    %vm395 = vweird.f32 %v388
    %vm396 = vweird.f32 %v389
    %vm397 = vmor %vm395, %vm396
    %v398 = vsel %vm397, %v389, %v394
    %v399 = vmul.f32 %v387, %v398
    %v401 = vperm.slane %v399, 0
    %v403 = vmul.f32 %v377, %v401
    %v404 = vld [vmem:[%s9] sm:$0x1]
    %v406 = vperm.slane %v404, 0
    %v408 = vadd.f32 %v403, %v406
    %v409 = vmax.f32 %v408, 0.0
    %vm410 = vcmask 123904
    %v411 = vsel %vm410, %v409, 0.0
    %v412 = vrot.slane %v411, 4
    %v413 = vadd.f32 %v411, %v412
    %v414 = vrot.slane %v413, 2
    %v415 = vadd.f32 %v413, %v414
    %v416 = vrot.slane %v415, 1
    %v417 = vadd.f32 %v415, %v416
    %v418 = vrcp.pop 2.0
    %v419 = vmul.f32 2.0, %v418
    %v420 = vsub.f32 1.0, %v419
    %v421 = vmul.f32 %v418, %v420
    %v422 = vadd.f32 %v418, %v421
    %vm423 = vweird.f32 %v418
    %v424 = vsel %vm423, %v418, %v422
    %v425 = vmul.f32 %v417, %v424
    %v427 = vrot.slane %v409, 2
    %v429 = vsel %vm410, %v427, 0.0
    %v430 = vrot.slane %v429, 4
    %v431 = vadd.f32 %v429, %v430
    %v432 = vrot.slane %v431, 2
    %v433 = vadd.f32 %v431, %v432
    %v434 = vrot.slane %v433, 1
    %v435 = vadd.f32 %v433, %v434
    %v436 = vmul.f32 %v435, %v424
    %vm437 = vcmask 1040384
    %v438 = vsel %vm437, %v425, %v436
    %v439 = vld [vmem:[%s10] sm:$0xff]
    %v440 = vld [vmem:[%s10 + $0x8] sm:$0xff]
    %v441 = vld [vmem:[%s11] sm:$0x1]
    %v443 = vperm.slane %v441, 0
    %v446 = vsel %vm114, %v438, 0
    %448 = vmatpush.msra.mxu0 0.0
    %449 = vmatpush.msra.mxu0 0.0
    %450 = vmatpush.msra.mxu0 0.0
    %451 = vmatpush.msra.mxu0 0.0
    %452 = vmatpush.msra.mxu0 0.0
    %453 = vmatpush.msra.mxu0 0.0
    %454 = vmatpush.msra.mxu0 0.0
    %455 = vmatpush.msra.mxu0 0.0
    %456 = vmatpush.msra.mxu0 0.0
    %457 = vmatpush.msra.mxu0 0.0
    %458 = vmatpush.msra.mxu0 0.0
    %459 = vmatpush.msra.mxu0 0.0
    %460 = vmatpush.msra.mxu0 0.0
    %461 = vmatpush.msra.mxu0 0.0
    %462 = vmatpush.msra.mxu0 %v440
    %463 = vmatpush.msra.mxu0 %v439
    %464 = vmatmul.f32.gmra.mxu0 %v446
    %v465 = vpop.f32.mrf.mxu0
    %v466 = vadd.f32 %v443, %v465
    %467 = vdwg.mxu0
    %vm468 = vcmask 33792
    %469 = vst.msk [vmem:[#allocation4] sm:$0x3] %vm468, %v466
    // Predicated region
    $region50: #{simple_cnn_forward.1} parent=1 // pred_check
      _
    $region51: #{simple_cnn_forward.1} parent=1 // pred_check_branch
      %471 = sbr.rel (0) target = $region53
    $region52: #{simple_cnn_forward.1} parent=1 // pred_region
      %473 = vsyncadd [#allocation5], 0
      %s475 = sshll.u32 [#allocation4], 4
      %s476 = int_to_ptr.vmem [resolvable:$true] %s475
      %s477 = sshll.u32 %s12, 4
      %s478 = int_to_ptr.hbm [resolvable:$true] %s477
      %480 = dma.vmem_to_hbm [thread:$0]  %s476, 32, %s478, [#allocation5]
    $region53: #{simple_cnn_forward.1} parent=1 // pred_fallthru
      _
    // Predicated region
    $region54: #{simple_cnn_forward.1} parent=1 // pred_check
      _
    $region55: #{simple_cnn_forward.1} parent=1 // pred_check_branch
      %482 = sbr.rel (0) target = $region57
    $region56: #{simple_cnn_forward.1} parent=1 // pred_region
      %484 = dma.done [#allocation5], 32
    $region57: #{simple_cnn_forward.1} parent=1 // pred_fallthru
      _
    %485 = vsyncpa [#allocation5], 1

</llo_original>
